<compile_context>
chip_gen: v7x
topology: tpu7x:2x2x1
jax: 0.10.0
libtpu: 0.0.40
codegen_flags: <defaults>
</compile_context>

<pallas_src>
import math
import functools

import jax
import jax.numpy as jnp
from jax import lax
from jax.experimental import pallas as pl
from jax.experimental.pallas import tpu as pltpu


# ----------------------------- helpers -------------------------------------

def _round_up(v, m):
    return ((v + m - 1) // m) * m


def _pad2(a, rows, cols, fill=0.0):
    out = jnp.full((rows, cols), fill, dtype=jnp.float32)
    return out.at[: a.shape[0], : a.shape[1]].set(a.astype(jnp.float32))


def _pick_tile(n_pad, candidates):
    for t in candidates:
        if t <= n_pad and n_pad % t == 0:
            return t
    return n_pad


def _vmem_limit_bytes():
    # ~75% of physical VMEM (v5e/v6e: 128 MiB -> ~96 MiB, v7x: 64 MiB -> 48 MiB).
    cap = 64 * 1024 * 1024
    try:
        cap = int(pltpu.get_tpu_info().vmem_capacity_bytes)
    except Exception:
        pass
    return int(cap * 3 // 4)


# acos(|z|)/pi  ~=  sqrt(1-|z|) * poly(|z|)   (Abramowitz & Stegun 4.4.45,
# |err| <= 6.8e-5 rad — irrelevant for a similarity weight).  Coefficients are
# pre-divided by pi; the reference's 0.99999 factor is folded into the inverse
# norms on the host side.  Built only from mul/add/sqrt/select (pure VPU).
_ACOS_PI_COEFFS = tuple(c / math.pi for c in
                        (-0.0187293, 0.0742610, -0.2121144, 1.5707288))


# ----------------------------- Pallas kernels ------------------------------

def _adj_sim_kernel(tmask_ref,                                 # SMEM i32[gi, gj]
                    x_ref, xt_ref, invr_ref, invc_ref, idr_ref, idc_ref,
                    a_ref, dis_ref):
    """One (tm, tn) tile of the masked angular-similarity adjacency (bf16) plus
    the running row degree, finalized as d^-1/2 on the last column tile."""
    i = pl.program_id(0)
    j = pl.program_id(1)
    nj = pl.num_programs(1)

    @pl.when(j == 0)
    def _():
        dis_ref[...] = jnp.zeros_like(dis_ref)

    active = tmask_ref[i, j] != 0

    @pl.when(jnp.logical_not(active))
    def _():
        # Tile cannot intersect any same-dialogue block: skip all the math.
        a_ref[...] = jnp.zeros_like(a_ref)

    @pl.when(active)
    def _():
        gram = jnp.dot(x_ref[...], xt_ref[...],                # bf16 x bf16 -> f32
                       preferred_element_type=jnp.float32)
        # inverse norms already carry the 0.99999 factor.
        cos = jnp.clip(gram * invr_ref[...] * invc_ref[...], -0.99999, 0.99999)
        az = jnp.abs(cos)
        p = _ACOS_PI_COEFFS[0]
        for c in _ACOS_PI_COEFFS[1:]:
            p = p * az + c
        q = jnp.sqrt(jnp.maximum(1.0 - az, 0.0)) * p           # acos(|cos|)/pi
        sim = jnp.where(cos < 0.0, q, 1.0 - q)                 # 1 - acos(cos)/pi
        mask = idr_ref[...] == idc_ref[...]                    # same-dialogue block
        a = jnp.where(mask, sim, 0.0)
        a_ref[...] = a.astype(a_ref.dtype)                     # bf16 store
        dis_ref[...] = dis_ref[...] + jnp.sum(a, axis=1, keepdims=True)

    @pl.when(j == nj - 1)
    def _():
        dis_ref[...] = lax.rsqrt(jnp.maximum(dis_ref[...], 1e-12))   # emit d^-1/2


def _gcnii_fused_kernel(theta_ref,                      # scalar prefetch (SMEM f32[L])
                        a_ref, dis_ref, x_ref, w0_ref, b0_ref, wconv_ref,
                        w1x_ref, w1h_ref, b1_ref,       # inputs (mostly resident)
                        out_ref,                        # output (N, C_pad) f32
                        h0_s, h_s,                      # VMEM scratch (persist)
                        *, alpha, use_residue):
    l = pl.program_id(0)
    nlayers = pl.num_programs(0)

    @pl.when(l == 0)
    def _init():
        # fcs[0] + ReLU (eval-mode dropout == identity); bf16 matmul, f32 acc.
        h0 = jnp.maximum(
            jnp.dot(x_ref[...], w0_ref[...], preferred_element_type=jnp.float32)
            + b0_ref[...], 0.0)
        h0_s[...] = h0
        h_s[...] = h0

    # GraphConvolution (variant=False, residual=False), layer index = l + 1.
    # D^-1/2 A D^-1/2 @ h evaluated as d^-1/2 * (A @ (d^-1/2 * h)).
    theta = theta_ref[l]
    dis = dis_ref[...]                                   # (N, 1) f32, already d^-1/2
    h = h_s[...]
    hv = (dis * h).astype(jnp.bfloat16)
    hi = dis * jnp.dot(a_ref[...], hv, preferred_element_type=jnp.float32)
    support = (1.0 - alpha) * hi + alpha * h0_s[...]
    out = theta * jnp.dot(support.astype(jnp.bfloat16), wconv_ref[0],
                          preferred_element_type=jnp.float32) \
        + (1.0 - theta) * support
    h_s[...] = jnp.maximum(out, 0.0)                     # ReLU

    @pl.when(l == nlayers - 1)
    def _final():
        # concat([x, h]) @ W1 expressed as a split matmul (no concat buffer).
        logits = jnp.dot(h_s[...].astype(jnp.bfloat16), w1h_ref[...],
                         preferred_element_type=jnp.float32)
        if use_residue:
            logits = logits + jnp.dot(x_ref[...], w1x_ref[...],
                                      preferred_element_type=jnp.float32)
        logits = logits + b1_ref[...]                    # padded classes carry -1e30
        m = jnp.max(logits, axis=1, keepdims=True)
        lse = jnp.log(jnp.sum(jnp.exp(logits - m), axis=1, keepdims=True)) + m
        out_ref[...] = logits - lse


def _resident_spec(block_shape):
    """Grid-invariant BlockSpec for the layer kernel.  Its block index never
    changes across the layer grid, so single-buffering (Buffered(1)) halves the
    VMEM footprint with no pipelining loss.  Falls back to the default spec if
    pipeline_mode / Buffered is unavailable."""
    nd = len(block_shape)
    index_map = lambda l, th: (0,) * nd
    try:
        return pl.BlockSpec(block_shape, index_map,
                            pipeline_mode=pl.Buffered(buffer_count=1))
    except Exception:
        return pl.BlockSpec(block_shape, index_map)


# ------------------------------ forward wrapper -----------------------------

def gcnii_forward(params, x, block_ids, *, nlayers, lamda, alpha,
                  use_residue=True, return_feature=False):
    if return_feature:
        # TODO(synk): feature-only head (return_feature=True) not wired in.
        raise NotImplementedError("return_feature=True is not supported")
    assert nlayers >= 1

    n, nfeat = x.shape
    nhidden = params["fc0_w"].shape[1]
    nclass = params["fc1_w"].shape[1]

    f_pad = _round_up(nfeat, 128)
    h_pad = _round_up(nhidden, 128)
    c_pad = _round_up(nclass, 128)
    n_pad = _round_up(n, 128)
    tm = _pick_tile(n_pad, (512, 256, 128))
    tn = _pick_tile(n_pad, (1024, 512, 256, 128))
    gi, gj = n_pad // tm, n_pad // tn
    vmem_limit = _vmem_limit_bytes()

    # --- tiny O(N*F) prep; all O(N^2) work happens inside the kernels --------
    x_p = _pad2(x, n_pad, f_pad)
    x_bf = x_p.astype(jnp.bfloat16)                       # bf16 feeds the MXU
    xt_bf = x_bf.T                                        # transposed once, on host
    inv_norm = lax.rsqrt(jnp.sum(x_p * x_p, axis=1, keepdims=True) + 1e-12)
    inv_norm = inv_norm * math.sqrt(0.99999)              # fold the 0.99999 factor
    inv_r = inv_norm                                      # (n_pad, 1)
    inv_c = inv_norm.reshape(1, n_pad)

    pos = jnp.arange(n_pad, dtype=jnp.int32)
    ids_real = jnp.zeros((n_pad,), jnp.int32).at[:n].set(block_ids.astype(jnp.int32))
    # padded rows get unique negative ids -> never match anything (incl. each other)
    ids_full = jnp.where(pos < n, ids_real, -(pos + 2))
    ids_r = ids_full.reshape(n_pad, 1)
    ids_c = ids_full.reshape(1, n_pad)

    # --- per-tile activity mask (block-diagonal skip).  Assumes block_ids are
    # non-negative and non-decreasing (contiguous dialogues), as in create_big_adj.
    big = jnp.int32(1 << 30)
    real = pos < n
    rmin = jnp.where(real, ids_full, big).reshape(gi, tm).min(axis=1)
    rmax = jnp.where(real, ids_full, -big).reshape(gi, tm).max(axis=1)
    cmin = jnp.where(real, ids_full, big).reshape(gj, tn).min(axis=1)
    cmax = jnp.where(real, ids_full, -big).reshape(gj, tn).max(axis=1)
    active = ((rmin[:, None] <= cmax[None, :]) & (cmin[None, :] <= rmax[:, None])
              & (rmax[:, None] >= 0) & (cmax[None, :] >= 0))
    tile_mask = active.astype(jnp.int32)                  # (gi, gj) -> SMEM prefetch

    # --- padded parameters (bf16 weights for the MXU, f32 biases) ------------
    w0_p = _pad2(params["fc0_w"], f_pad, h_pad).astype(jnp.bfloat16)
    b0_p = _pad2(params["fc0_b"], 1, h_pad)
    convw = jnp.stack(params["conv_w"], axis=0)           # (L, H, H)
    convw_p = jnp.zeros((nlayers, h_pad, h_pad), jnp.float32)
    convw_p = convw_p.at[:, :nhidden, :nhidden].set(convw.astype(jnp.float32))
    convw_p = convw_p.astype(jnp.bfloat16)
    fc1_w = params["fc1_w"]
    if use_residue:
        w1x_p = _pad2(fc1_w[:nfeat], f_pad, c_pad).astype(jnp.bfloat16)
        w1h_p = _pad2(fc1_w[nfeat:], h_pad, c_pad).astype(jnp.bfloat16)
    else:
        w1x_p = jnp.zeros((f_pad, c_pad), jnp.bfloat16)
        w1h_p = _pad2(fc1_w, h_pad, c_pad).astype(jnp.bfloat16)
    b1_p = _pad2(params["fc1_b"], 1, c_pad, fill=-1e30)   # pad classes -> -inf logits

    thetas = jnp.asarray([math.log(lamda / (i + 1) + 1.0) for i in range(nlayers)],
                         dtype=jnp.float32)

    # --- kernel 1: fused adjacency similarity + d^-1/2 (2-D tiled, block-skip)
    a_mat, d_isqrt = pl.pallas_call(
        _adj_sim_kernel,
        out_shape=(jax.ShapeDtypeStruct((n_pad, n_pad), jnp.bfloat16),
                   jax.ShapeDtypeStruct((n_pad, 1), jnp.float32)),
        grid_spec=pltpu.PrefetchScalarGridSpec(
            num_scalar_prefetch=1,                                   # tile_mask
            grid=(gi, gj),
            in_specs=[
                pl.BlockSpec((tm, f_pad), lambda i, j, tmsk: (i, 0)),  # x rows (bf16)
                pl.BlockSpec((f_pad, tn), lambda i, j, tmsk: (0, j)),  # xT cols (bf16)
                pl.BlockSpec((tm, 1), lambda i, j, tmsk: (i, 0)),      # inv-norm rows
                pl.BlockSpec((1, tn), lambda i, j, tmsk: (0, j)),      # inv-norm cols
                pl.BlockSpec((tm, 1), lambda i, j, tmsk: (i, 0)),      # ids rows
                pl.BlockSpec((1, tn), lambda i, j, tmsk: (0, j)),      # ids cols
            ],
            out_specs=(pl.BlockSpec((tm, tn), lambda i, j, tmsk: (i, j)),
                       pl.BlockSpec((tm, 1), lambda i, j, tmsk: (i, 0))),
        ),
        compiler_params=pltpu.CompilerParams(
            dimension_semantics=("parallel", "arbitrary"),
            vmem_limit_bytes=vmem_limit),
    )(tile_mask, x_bf, xt_bf, inv_r, inv_c, ids_r, ids_c)

    # --- kernel 2: the whole GCNII network, layer loop on an "arbitrary" grid.
    # A (bf16), x, weights stay VMEM-resident (single-buffered); conv_w streamed.
    grid_spec = pltpu.PrefetchScalarGridSpec(
        num_scalar_prefetch=1,                                       # thetas -> SMEM
        grid=(nlayers,),
        in_specs=[
            _resident_spec((n_pad, n_pad)),                          # A (bf16)
            _resident_spec((n_pad, 1)),                              # d^-1/2
            _resident_spec((n_pad, f_pad)),                          # x (bf16)
            _resident_spec((f_pad, h_pad)),                          # fc0 weight
            _resident_spec((1, h_pad)),                              # fc0 bias
            pl.BlockSpec((1, h_pad, h_pad), lambda l, th: (l, 0, 0)),  # conv_w[l]
            _resident_spec((f_pad, c_pad)),                          # fc1 (x part)
            _resident_spec((h_pad, c_pad)),                          # fc1 (h part)
            _resident_spec((1, c_pad)),                              # fc1 bias
        ],
        out_specs=pl.BlockSpec((n_pad, c_pad), lambda l, th: (0, 0)),
        scratch_shapes=[pltpu.VMEM((n_pad, h_pad), jnp.float32),     # h0
                        pltpu.VMEM((n_pad, h_pad), jnp.float32)],    # running h
    )
    out_p = pl.pallas_call(
        functools.partial(_gcnii_fused_kernel, alpha=alpha, use_residue=use_residue),
        out_shape=jax.ShapeDtypeStruct((n_pad, c_pad), jnp.float32),
        grid_spec=grid_spec,
        compiler_params=pltpu.CompilerParams(
            dimension_semantics=("arbitrary",),
            vmem_limit_bytes=vmem_limit),
    )(thetas, a_mat, d_isqrt, x_bf, w0_p, b0_p, convw_p, w1x_p, w1h_p, b1_p)

    return out_p[:n, :nclass]


# --------------------------- deterministic params ---------------------------

def init_params(key, nfeat, nlayers, nhidden, nclass, use_residue=True):
    keys = jax.random.split(key, 4 + nlayers)
    # nn.Linear(nfeat, nhidden): uniform(+-1/sqrt(fan_in)); stored transposed (in, out)
    b = 1.0 / math.sqrt(nfeat)
    fc0_w = jax.random.uniform(keys[0], (nfeat, nhidden), jnp.float32, -b, b)
    fc0_b = jax.random.uniform(keys[1], (1, nhidden), jnp.float32, -b, b)
    # GraphConvolution weights: uniform(+-1/sqrt(out_features)), shape (H, H)
    stdv = 1.0 / math.sqrt(nhidden)
    conv_w = [jax.random.uniform(keys[4 + i], (nhidden, nhidden), jnp.float32,
                                 -stdv, stdv) for i in range(nlayers)]
    # nn.Linear(nfeat + nhidden, nclass)
    fin = nfeat + nhidden if use_residue else nhidden
    b2 = 1.0 / math.sqrt(fin)
    fc1_w = jax.random.uniform(keys[2], (fin, nclass), jnp.float32, -b2, b2)
    fc1_b = jax.random.uniform(keys[3], (1, nclass), jnp.float32, -b2, b2)
    return {"fc0_w": fc0_w, "fc0_b": fc0_b,
            "conv_w": conv_w, "fc1_w": fc1_w, "fc1_b": fc1_b}


# ----------------------------------- main -----------------------------------

if __name__ == "__main__":
    nfeat, nhidden, nclass, nlayers = 32, 32, 4, 2
    lamda, alpha = 0.5, 0.1
    dia_len = [9, 7]                       # two dialogues -> N = 16 nodes
    n_total = sum(dia_len)

    key = jax.random.PRNGKey(0)
    kx, kp = jax.random.split(key)
    x = jax.random.normal(kx, (n_total, nfeat), dtype=jnp.float32)
    block_ids = jnp.concatenate(
        [jnp.full((l,), i, dtype=jnp.int32) for i, l in enumerate(dia_len)])

    params = init_params(kp, nfeat, nlayers, nhidden, nclass, use_residue=True)

    out = gcnii_forward(params, x, block_ids, nlayers=nlayers,
                        lamda=lamda, alpha=alpha,
                        use_residue=True, return_feature=False)
    out = jax.block_until_ready(out)

    assert out.shape == (n_total, nclass)
    assert bool(jnp.all(jnp.isfinite(out)))
    # log_softmax rows must exponentiate-sum to 1
    assert bool(jnp.allclose(jnp.sum(jnp.exp(out), axis=1), 1.0, atol=1e-3))
    print("KERNEL_OK")
</pallas_src>

<mosaic_0001>
module attributes {stable_mosaic.version = 11 : i64} {
  func.func @_adj_sim_kernel(%arg0: i32, %arg1: i32, %arg2: memref<1x1xi32, #tpu.memory_space<smem>>, %arg3: memref<128x128xbf16, #tpu.memory_space<vmem>>, %arg4: memref<128x128xbf16, #tpu.memory_space<vmem>>, %arg5: memref<128x1xf32, #tpu.memory_space<vmem>>, %arg6: memref<1x128xf32, #tpu.memory_space<vmem>>, %arg7: memref<128x1xi32, #tpu.memory_space<vmem>>, %arg8: memref<1x128xi32, #tpu.memory_space<vmem>>, %arg9: memref<128x128xbf16, #tpu.memory_space<vmem>>, %arg10: memref<128x1xf32, #tpu.memory_space<vmem>>) attributes {dimension_semantics = [#tpu.dimension_semantics<parallel>, #tpu.dimension_semantics<arbitrary>], iteration_bounds = array<i64: 1, 1>, scalar_prefetch = 1 : i64, scratch_operands = 0 : i64, tpu.core_type = #tpu.core_type<tc>, window_params = [{transform_indices = @transform_0, window_bounds = array<i64: 128, 128>}, {transform_indices = @transform_1, window_bounds = array<i64: 128, 128>}, {transform_indices = @transform_2, window_bounds = array<i64: 128, 1>}, {transform_indices = @transform_3, window_bounds = array<i64: 1, 128>}, {transform_indices = @transform_4, window_bounds = array<i64: 128, 1>}, {transform_indices = @transform_5, window_bounds = array<i64: 1, 128>}, {transform_indices = @transform_6, window_bounds = array<i64: 128, 128>}, {transform_indices = @transform_7, window_bounds = array<i64: 128, 1>}]} {
    %c0_i32 = arith.constant 0 : i32
    %0 = arith.cmpi eq, %arg1, %c0_i32 : i32
    %1 = arith.extui %0 : i1 to i32
    %c0_i32_0 = arith.constant 0 : i32
    %2 = arith.cmpi ne, %1, %c0_i32_0 : i32
    scf.if %2 {
      %cst = arith.constant 0.000000e+00 : f32
      %15 = vector.broadcast %cst : f32 to vector<128x1xf32>
      %c0 = arith.constant 0 : index
      %c0_6 = arith.constant 0 : index
      %16 = vector.load %arg10[%c0, %c0_6] : memref<128x1xf32, #tpu.memory_space<vmem>>, vector<128x1xf32>
      tpu.vector_store %arg10[%c0, %c0_6], %15 {strides = array<i32>} : memref<128x1xf32, #tpu.memory_space<vmem>>, vector<128x1xf32>,
    } else {
    }
    %3 = arith.index_cast %arg0 : i32 to index
    %4 = arith.index_cast %arg1 : i32 to index
    %5 = memref.load %arg2[%3, %4] : memref<1x1xi32, #tpu.memory_space<smem>>
    %c0_i32_1 = arith.constant 0 : i32
    %6 = arith.cmpi ne, %5, %c0_i32_1 : i32
    %true = arith.constant true
    %7 = arith.xori %6, %true : i1
    %8 = arith.extui %7 : i1 to i32
    %c0_i32_2 = arith.constant 0 : i32
    %9 = arith.cmpi ne, %8, %c0_i32_2 : i32
    scf.if %9 {
      %cst = arith.constant 0.000000e+00 : bf16
      %15 = vector.broadcast %cst : bf16 to vector<128x128xbf16>
      %c0 = arith.constant 0 : index
      %c0_6 = arith.constant 0 : index
      %16 = vector.load %arg9[%c0, %c0_6] : memref<128x128xbf16, #tpu.memory_space<vmem>>, vector<128x128xbf16>
      tpu.vector_store %arg9[%c0, %c0_6], %15 {strides = array<i32>} : memref<128x128xbf16, #tpu.memory_space<vmem>>, vector<128x128xbf16>,
    } else {
    }
    %10 = arith.extui %6 : i1 to i32
    %c0_i32_3 = arith.constant 0 : i32
    %11 = arith.cmpi ne, %10, %c0_i32_3 : i32
    scf.if %11 {
      %c0 = arith.constant 0 : index
      %c0_6 = arith.constant 0 : index
      %15 = vector.load %arg3[%c0, %c0_6] : memref<128x128xbf16, #tpu.memory_space<vmem>>, vector<128x128xbf16>
      %c0_7 = arith.constant 0 : index
      %c0_8 = arith.constant 0 : index
      %16 = vector.load %arg4[%c0_7, %c0_8] : memref<128x128xbf16, #tpu.memory_space<vmem>>, vector<128x128xbf16>
      %cst = arith.constant dense<0.000000e+00> : vector<128x128xf32>
      %17 = tpu.matmul %15, %16, %cst {dimension_numbers = #tpu.dot_dimension_numbers<[1], [0], [0], [1], [0, 0, 1, 1], [], []>} : vector<128x128xbf16>, vector<128x128xbf16>, vector<128x128xf32> -> vector<128x128xf32>
      %c0_9 = arith.constant 0 : index
      %c0_10 = arith.constant 0 : index
      %18 = vector.load %arg5[%c0_9, %c0_10] : memref<128x1xf32, #tpu.memory_space<vmem>>, vector<128x1xf32>
      %19 = vector.broadcast %18 : vector<128x1xf32> to vector<128x128xf32>
      %20 = arith.mulf %17, %19 : vector<128x128xf32>
      %c0_11 = arith.constant 0 : index
      %c0_12 = arith.constant 0 : index
      %21 = vector.load %arg6[%c0_11, %c0_12] : memref<1x128xf32, #tpu.memory_space<vmem>>, vector<1x128xf32>
      %22 = vector.broadcast %21 : vector<1x128xf32> to vector<128x128xf32>
      %23 = arith.mulf %20, %22 : vector<128x128xf32>
      %cst_13 = arith.constant -0.999989986 : f32
      %cst_14 = arith.constant 0.999989986 : f32
      %24 = vector.broadcast %cst_13 : f32 to vector<128x128xf32>
      %25 = arith.maximumf %24, %23 : vector<128x128xf32>
      %26 = vector.broadcast %cst_14 : f32 to vector<128x128xf32>
      %27 = arith.minimumf %26, %25 : vector<128x128xf32>
      %28 = math.absf %27 : vector<128x128xf32>
      %cst_15 = arith.constant -0.0059617213 : f32
      %29 = vector.broadcast %cst_15 : f32 to vector<128x128xf32>
      %30 = arith.mulf %29, %28 : vector<128x128xf32>
      %cst_16 = arith.constant 0.02363801 : f32
      %31 = vector.broadcast %cst_16 : f32 to vector<128x128xf32>
      %32 = arith.addf %30, %31 : vector<128x128xf32>
      %33 = arith.mulf %32, %28 : vector<128x128xf32>
      %cst_17 = arith.constant -0.0675181076 : f32
      %34 = vector.broadcast %cst_17 : f32 to vector<128x128xf32>
      %35 = arith.addf %33, %34 : vector<128x128xf32>
      %36 = arith.mulf %35, %28 : vector<128x128xf32>
      %cst_18 = arith.constant 0.499978513 : f32
      %37 = vector.broadcast %cst_18 : f32 to vector<128x128xf32>
      %38 = arith.addf %36, %37 : vector<128x128xf32>
      %cst_19 = arith.constant 1.000000e+00 : f32
      %39 = vector.broadcast %cst_19 : f32 to vector<128x128xf32>
      %40 = arith.subf %39, %28 : vector<128x128xf32>
      %cst_20 = arith.constant 0.000000e+00 : f32
      %41 = vector.broadcast %cst_20 : f32 to vector<128x128xf32>
      %42 = arith.maximumf %40, %41 : vector<128x128xf32>
      %43 = math.sqrt %42 : vector<128x128xf32>
      %44 = arith.mulf %43, %38 : vector<128x128xf32>
      %cst_21 = arith.constant 0.000000e+00 : f32
      %45 = vector.broadcast %cst_21 : f32 to vector<128x128xf32>
      %46 = arith.cmpf olt, %27, %45 : vector<128x128xf32>
      %cst_22 = arith.constant 1.000000e+00 : f32
      %47 = vector.broadcast %cst_22 : f32 to vector<128x128xf32>
      %48 = arith.subf %47, %44 : vector<128x128xf32>
      %49 = arith.select %46, %44, %48 : vector<128x128xi1>, vector<128x128xf32>
      %c0_23 = arith.constant 0 : index
      %c0_24 = arith.constant 0 : index
      %50 = vector.load %arg7[%c0_23, %c0_24] : memref<128x1xi32, #tpu.memory_space<vmem>>, vector<128x1xi32>
      %c0_25 = arith.constant 0 : index
      %c0_26 = arith.constant 0 : index
      %51 = vector.load %arg8[%c0_25, %c0_26] : memref<1x128xi32, #tpu.memory_space<vmem>>, vector<1x128xi32>
      %52 = vector.broadcast %50 : vector<128x1xi32> to vector<128x128xi32>
      %53 = vector.broadcast %51 : vector<1x128xi32> to vector<128x128xi32>
      %54 = arith.cmpi eq, %52, %53 : vector<128x128xi32>
      %cst_27 = arith.constant 0.000000e+00 : f32
      %55 = vector.broadcast %cst_27 : f32 to vector<128x128xf32>
      %56 = arith.select %54, %49, %55 : vector<128x128xi1>, vector<128x128xf32>
      %57 = arith.truncf %56 : vector<128x128xf32> to vector<128x128xbf16>
      %c0_28 = arith.constant 0 : index
      %c0_29 = arith.constant 0 : index
      %58 = vector.load %arg9[%c0_28, %c0_29] : memref<128x128xbf16, #tpu.memory_space<vmem>>, vector<128x128xbf16>
      tpu.vector_store %arg9[%c0_28, %c0_29], %57 {strides = array<i32>} : memref<128x128xbf16, #tpu.memory_space<vmem>>, vector<128x128xbf16>,
      %c0_30 = arith.constant 0 : index
      %c0_31 = arith.constant 0 : index
      %59 = vector.load %arg10[%c0_30, %c0_31] : memref<128x1xf32, #tpu.memory_space<vmem>>, vector<128x1xf32>
      %cst_32 = arith.constant dense<0.000000e+00> : vector<128xf32>
      %60 = vector.multi_reduction <add>, %56, %cst_32 [1] : vector<128x128xf32> to vector<128xf32>
      %61 = vector.shape_cast %60 : vector<128xf32> to vector<128x1xf32>
      %62 = arith.addf %59, %61 : vector<128x1xf32>
      %c0_33 = arith.constant 0 : index
      %c0_34 = arith.constant 0 : index
      %63 = vector.load %arg10[%c0_33, %c0_34] : memref<128x1xf32, #tpu.memory_space<vmem>>, vector<128x1xf32>
      tpu.vector_store %arg10[%c0_33, %c0_34], %62 {strides = array<i32>} : memref<128x1xf32, #tpu.memory_space<vmem>>, vector<128x1xf32>,
    } else {
    }
    %c0_i32_4 = arith.constant 0 : i32
    %12 = arith.cmpi eq, %arg1, %c0_i32_4 : i32
    %13 = arith.extui %12 : i1 to i32
    %c0_i32_5 = arith.constant 0 : i32
    %14 = arith.cmpi ne, %13, %c0_i32_5 : i32
    scf.if %14 {
      %c0 = arith.constant 0 : index
      %c0_6 = arith.constant 0 : index
      %15 = vector.load %arg10[%c0, %c0_6] : memref<128x1xf32, #tpu.memory_space<vmem>>, vector<128x1xf32>
      %cst = arith.constant 9.99999996E-13 : f32
      %16 = vector.broadcast %cst : f32 to vector<128x1xf32>
      %17 = arith.maximumf %15, %16 : vector<128x1xf32>
      %18 = math.rsqrt %17 : vector<128x1xf32>
      %c0_7 = arith.constant 0 : index
      %c0_8 = arith.constant 0 : index
      %19 = vector.load %arg10[%c0_7, %c0_8] : memref<128x1xf32, #tpu.memory_space<vmem>>, vector<128x1xf32>
      tpu.vector_store %arg10[%c0_7, %c0_8], %18 {strides = array<i32>} : memref<128x1xf32, #tpu.memory_space<vmem>>, vector<128x1xf32>,
    } else {
    }
    return
  }
  func.func @transform_0(%arg0: i32, %arg1: i32, %arg2: memref<1x1xi32, #tpu.memory_space<smem>>) -> (i32, i32) {
    %c0_i32 = arith.constant 0 : i32
    %c0_i32_0 = arith.constant 0 : i32
    return %arg0, %c0_i32 : i32, i32
  }
  func.func @transform_1(%arg0: i32, %arg1: i32, %arg2: memref<1x1xi32, #tpu.memory_space<smem>>) -> (i32, i32) {
    %c0_i32 = arith.constant 0 : i32
    %c0_i32_0 = arith.constant 0 : i32
    return %c0_i32, %arg1 : i32, i32
  }
  func.func @transform_2(%arg0: i32, %arg1: i32, %arg2: memref<1x1xi32, #tpu.memory_space<smem>>) -> (i32, i32) {
    %c0_i32 = arith.constant 0 : i32
    %c0_i32_0 = arith.constant 0 : i32
    return %arg0, %c0_i32 : i32, i32
  }
  func.func @transform_3(%arg0: i32, %arg1: i32, %arg2: memref<1x1xi32, #tpu.memory_space<smem>>) -> (i32, i32) {
    %c0_i32 = arith.constant 0 : i32
    %c0_i32_0 = arith.constant 0 : i32
    return %c0_i32, %arg1 : i32, i32
  }
  func.func @transform_4(%arg0: i32, %arg1: i32, %arg2: memref<1x1xi32, #tpu.memory_space<smem>>) -> (i32, i32) {
    %c0_i32 = arith.constant 0 : i32
    %c0_i32_0 = arith.constant 0 : i32
    return %arg0, %c0_i32 : i32, i32
  }
  func.func @transform_5(%arg0: i32, %arg1: i32, %arg2: memref<1x1xi32, #tpu.memory_space<smem>>) -> (i32, i32) {
    %c0_i32 = arith.constant 0 : i32
    %c0_i32_0 = arith.constant 0 : i32
    return %c0_i32, %arg1 : i32, i32
  }
  func.func @transform_6(%arg0: i32, %arg1: i32, %arg2: memref<1x1xi32, #tpu.memory_space<smem>>) -> (i32, i32) {
    %c0_i32 = arith.constant 0 : i32
    return %arg0, %arg1 : i32, i32
  }
  func.func @transform_7(%arg0: i32, %arg1: i32, %arg2: memref<1x1xi32, #tpu.memory_space<smem>>) -> (i32, i32) {
    %c0_i32 = arith.constant 0 : i32
    %c0_i32_0 = arith.constant 0 : i32
    return %arg0, %c0_i32 : i32, i32
  }
}

</mosaic_0001>

<llo_original>
// kernel: tpu_custom_call.1
$region0: #{tpu_custom_call.1}
  #allocation0 [shape = 'u32[]', space=smem, size = 0x4, offset = 0x4, fixed_abs, tag = 'smem constant byte address 0x4 - core index']
  #allocation1 [shape = 'u32[144,128]{1,0:T(1,128)}', space=vmem, size = 0x12000, scoped, tag = 'internal scratch']
  #allocation2 [shape = 's32[1]{0}', space=sflag, size = 0x4, scoped, tag = 'scoped memory for tpu_custom_call.1']
  #allocation3 [shape = 's32[1,1]{1,0:T(1,128)S(6)}', space=smem, size = 0x200, scoped, tag = 'prefetched SMEM operand 0']
  %s0 = inlined_call_operand.<no memory space> [shape: s32[1,1], index: 0, kind: input, shape index: {}]
  %s1 = inlined_call_operand.vmem [shape: bf16[128,128], index: 1, kind: input, shape index: {}]
  %s2 = inlined_call_operand.vmem [shape: bf16[128,128], index: 2, kind: input, shape index: {}]
  %s3 = inlined_call_operand.vmem [shape: f32[128,1], index: 3, kind: input, shape index: {}]
  %s4 = inlined_call_operand.vmem [shape: f32[1,128], index: 4, kind: input, shape index: {}]
  %s5 = inlined_call_operand.vmem [shape: s32[128,1], index: 5, kind: input, shape index: {}]
  %s6 = inlined_call_operand.vmem [shape: s32[1,128], index: 6, kind: input, shape index: {}]
  %s7 = inlined_call_operand.hbm [shape: bf16[128,128], index: 7, kind: output, shape index: {0}]
  %s8 = inlined_call_operand.vmem [shape: f32[128,1], index: 8, kind: output, shape index: {1}]
  %9 = xla_tuple %s7, %s8
  %s10 = sld [smem:[#allocation0]]
  $region58: #{tpu_custom_call.1} parent=0
    _
  %s12 = ssub.s32 1, %s10
  %s13 = scalar_select 0, %s12, %s10
  %14 = sst [smem:[#allocation3]] %s0
  $region1: #{tpu_custom_call.1} parent=0
    #allocation4 [shape = 'u8[32768]{0}', space=vmem, size = 0x8000, scoped, tag = 'output window, operand 0, single buffered']
    #allocation5 [shape = 's32[1]{0}', space=sflag, size = 0x4, scoped, tag = 'scoped memory for tpu_custom_call.1']
    %15 = vsyncpa [#allocation5], 0
    // Predicated region
    $region2: #{tpu_custom_call.1} parent=1 // pred_check
      _
    $region3: #{tpu_custom_call.1} parent=1 // pred_check_branch
      %17 = sbr.rel (0) target = $region5
    $region4: #{tpu_custom_call.1} parent=1 // pred_region
      _
    $region5: #{tpu_custom_call.1} parent=1 // pred_fallthru
      _
    // Predicated region
    $region6: #{tpu_custom_call.1} parent=1 // pred_check
      _
    $region7: #{tpu_custom_call.1} parent=1 // pred_check_branch
      %19 = sbr.rel (0) target = $region9
    $region8: #{tpu_custom_call.1} parent=1 // pred_region
      _
    $region9: #{tpu_custom_call.1} parent=1 // pred_fallthru
      _
    // Predicated region
    $region10: #{tpu_custom_call.1} parent=1 // pred_check
      _
    $region11: #{tpu_custom_call.1} parent=1 // pred_check_branch
      %21 = sbr.rel (0) target = $region13
    $region12: #{tpu_custom_call.1} parent=1 // pred_region
      _
    $region13: #{tpu_custom_call.1} parent=1 // pred_fallthru
      _
    // Predicated region
    $region14: #{tpu_custom_call.1} parent=1 // pred_check
      _
    $region15: #{tpu_custom_call.1} parent=1 // pred_check_branch
      %23 = sbr.rel (0) target = $region17
    $region16: #{tpu_custom_call.1} parent=1 // pred_region
      _
    $region17: #{tpu_custom_call.1} parent=1 // pred_fallthru
      _
    // Predicated region
    $region18: #{tpu_custom_call.1} parent=1 // pred_check
      _
    $region19: #{tpu_custom_call.1} parent=1 // pred_check_branch
      %25 = sbr.rel (0) target = $region21
    $region20: #{tpu_custom_call.1} parent=1 // pred_region
      _
    $region21: #{tpu_custom_call.1} parent=1 // pred_fallthru
      _
    // Predicated region
    $region22: #{tpu_custom_call.1} parent=1 // pred_check
      _
    $region23: #{tpu_custom_call.1} parent=1 // pred_check_branch
      %27 = sbr.rel (0) target = $region25
    $region24: #{tpu_custom_call.1} parent=1 // pred_region
      _
    $region25: #{tpu_custom_call.1} parent=1 // pred_fallthru
      _
    %p29 = scmp.eq.s32.totalorder 0, 0
    // Predicated region
    $region26: #{tpu_custom_call.1} parent=1 // pred_check
      %p30 = pneg %p29
    $region27: #{tpu_custom_call.1} parent=1 // pred_check_branch
      %32 = sbr.rel (%p30) target = $region29
    $region28: #{tpu_custom_call.1} parent=1 // pred_region
      %vm33 = vcmask 7168
      %34 = vst.msk [vmem:[%s8] sm:$0xff] %vm33, 0.0
      %35 = vst.msk [vmem:[%s8 + $0x8] sm:$0xff] %vm33, 0.0
      %36 = vst.msk [vmem:[%s8 + $0x10] sm:$0xff] %vm33, 0.0
      %37 = vst.msk [vmem:[%s8 + $0x18] sm:$0xff] %vm33, 0.0
      %38 = vst.msk [vmem:[%s8 + $0x20] sm:$0xff] %vm33, 0.0
      %39 = vst.msk [vmem:[%s8 + $0x28] sm:$0xff] %vm33, 0.0
      %40 = vst.msk [vmem:[%s8 + $0x30] sm:$0xff] %vm33, 0.0
      %41 = vst.msk [vmem:[%s8 + $0x38] sm:$0xff] %vm33, 0.0
      %42 = vst.msk [vmem:[%s8 + $0x40] sm:$0xff] %vm33, 0.0
      %43 = vst.msk [vmem:[%s8 + $0x48] sm:$0xff] %vm33, 0.0
      %44 = vst.msk [vmem:[%s8 + $0x50] sm:$0xff] %vm33, 0.0
      %45 = vst.msk [vmem:[%s8 + $0x58] sm:$0xff] %vm33, 0.0
      %46 = vst.msk [vmem:[%s8 + $0x60] sm:$0xff] %vm33, 0.0
      %47 = vst.msk [vmem:[%s8 + $0x68] sm:$0xff] %vm33, 0.0
      %48 = vst.msk [vmem:[%s8 + $0x70] sm:$0xff] %vm33, 0.0
      %49 = vst.msk [vmem:[%s8 + $0x78] sm:$0xff] %vm33, 0.0
    $region29: #{tpu_custom_call.1} parent=1 // pred_fallthru
      _
    %s50 = sadd.s32 0, 0
    %s51 = smul.u32 %s50, 128
    %s52 = sadd.s32 %s51, 0
    %s53 = sld [smem:[#allocation3 + %s52]]
    %p54 = scmp.ne.s32.totalorder %s53, 0
    %p55 = scmp.eq.s32.totalorder %s53, 0
    // Predicated region
    $region30: #{tpu_custom_call.1} parent=1 // pred_check
      %p56 = pneg %p55
    $region31: #{tpu_custom_call.1} parent=1 // pred_check_branch
      %58 = sbr.rel (%p56) target = $region33
    $region32: #{tpu_custom_call.1} parent=1 // pred_region
      %59 = vst [vmem:[#allocation4] sm:$0xf] 0
      %60 = vst [vmem:[#allocation4 + $0x4] sm:$0xf] 0
      %61 = vst [vmem:[#allocation4 + $0x8] sm:$0xf] 0
      %62 = vst [vmem:[#allocation4 + $0xc] sm:$0xf] 0
      %63 = vst [vmem:[#allocation4 + $0x10] sm:$0xf] 0
      %64 = vst [vmem:[#allocation4 + $0x14] sm:$0xf] 0
      %65 = vst [vmem:[#allocation4 + $0x18] sm:$0xf] 0
      %66 = vst [vmem:[#allocation4 + $0x1c] sm:$0xf] 0
      %67 = vst [vmem:[#allocation4 + $0x20] sm:$0xf] 0
      %68 = vst [vmem:[#allocation4 + $0x24] sm:$0xf] 0
      %69 = vst [vmem:[#allocation4 + $0x28] sm:$0xf] 0
      %70 = vst [vmem:[#allocation4 + $0x2c] sm:$0xf] 0
      %71 = vst [vmem:[#allocation4 + $0x30] sm:$0xf] 0
      %72 = vst [vmem:[#allocation4 + $0x34] sm:$0xf] 0
      %73 = vst [vmem:[#allocation4 + $0x38] sm:$0xf] 0
      %74 = vst [vmem:[#allocation4 + $0x3c] sm:$0xf] 0
    $region33: #{tpu_custom_call.1} parent=1 // pred_fallthru
      _
    // Predicated region
    $region34: #{tpu_custom_call.1} parent=1 // pred_check
      %p75 = pneg %p54
    $region35: #{tpu_custom_call.1} parent=1 // pred_check_branch
      %77 = sbr.rel (%p75) target = $region37
    $region36: #{tpu_custom_call.1} parent=1 // pred_region
      %v78 = vld [vmem:[%s1] sm:$0xf]
      %v79 = vld [vmem:[%s1 + $0x4] sm:$0xf]
      %v80 = vld [vmem:[%s1 + $0x8] sm:$0xf]
      %v81 = vld [vmem:[%s1 + $0xc] sm:$0xf]
      %v82 = vld [vmem:[%s1 + $0x10] sm:$0xf]
      %v83 = vld [vmem:[%s1 + $0x14] sm:$0xf]
      %v84 = vld [vmem:[%s1 + $0x18] sm:$0xf]
      %v85 = vld [vmem:[%s1 + $0x1c] sm:$0xf]
      %v86 = vld [vmem:[%s1 + $0x20] sm:$0xf]
      %v87 = vld [vmem:[%s1 + $0x24] sm:$0xf]
      %v88 = vld [vmem:[%s1 + $0x28] sm:$0xf]
      %v89 = vld [vmem:[%s1 + $0x2c] sm:$0xf]
      %v90 = vld [vmem:[%s1 + $0x30] sm:$0xf]
      %v91 = vld [vmem:[%s1 + $0x34] sm:$0xf]
      %v92 = vld [vmem:[%s1 + $0x38] sm:$0xf]
      %v93 = vld [vmem:[%s1 + $0x3c] sm:$0xf]
      %v94 = vld [vmem:[%s2] sm:$0xf]
      %v95 = vld [vmem:[%s2 + $0x4] sm:$0xf]
      %v96 = vld [vmem:[%s2 + $0x8] sm:$0xf]
      %v97 = vld [vmem:[%s2 + $0xc] sm:$0xf]
      %v98 = vld [vmem:[%s2 + $0x10] sm:$0xf]
      %v99 = vld [vmem:[%s2 + $0x14] sm:$0xf]
      %v100 = vld [vmem:[%s2 + $0x18] sm:$0xf]
      %v101 = vld [vmem:[%s2 + $0x1c] sm:$0xf]
      %v102 = vld [vmem:[%s2 + $0x20] sm:$0xf]
      %v103 = vld [vmem:[%s2 + $0x24] sm:$0xf]
      %v104 = vld [vmem:[%s2 + $0x28] sm:$0xf]
      %v105 = vld [vmem:[%s2 + $0x2c] sm:$0xf]
      %v106 = vld [vmem:[%s2 + $0x30] sm:$0xf]
      %v107 = vld [vmem:[%s2 + $0x34] sm:$0xf]
      %v108 = vld [vmem:[%s2 + $0x38] sm:$0xf]
      %v109 = vld [vmem:[%s2 + $0x3c] sm:$0xf]
      %v126 = vunpack.c.l.b16 %v78
      %v127 = vunpack.c.l.b16 %v79
      %v128 = vunpack.c.l.b16 %v80
      %v129 = vunpack.c.l.b16 %v81
      %v130 = vunpack.c.l.b16 %v82
      %v131 = vunpack.c.l.b16 %v83
      %v132 = vunpack.c.l.b16 %v84
      %v133 = vunpack.c.l.b16 %v85
      %v134 = vunpack.c.l.b16 %v86
      %v135 = vunpack.c.l.b16 %v87
      %v136 = vunpack.c.l.b16 %v88
      %v137 = vunpack.c.l.b16 %v89
      %v138 = vunpack.c.l.b16 %v90
      %v139 = vunpack.c.l.b16 %v91
      %v140 = vunpack.c.l.b16 %v92
      %v141 = vunpack.c.l.b16 %v93
      %v142 = vpack.c.b16 %v127, %v126
      %v143 = vpack.c.b16 %v129, %v128
      %v144 = vpack.c.b16 %v131, %v130
      %v145 = vpack.c.b16 %v133, %v132
      %v146 = vpack.c.b16 %v135, %v134
      %v147 = vpack.c.b16 %v137, %v136
      %v148 = vpack.c.b16 %v139, %v138
      %v149 = vpack.c.b16 %v141, %v140
      %v174 = vunpack.c.l.b16 %v94
      %v175 = vunpack.c.l.b16 %v95
      %v176 = vunpack.c.l.b16 %v96
      %v177 = vunpack.c.l.b16 %v97
      %v178 = vunpack.c.l.b16 %v98
      %v179 = vunpack.c.l.b16 %v99
      %v180 = vunpack.c.l.b16 %v100
      %v181 = vunpack.c.l.b16 %v101
      %v182 = vunpack.c.l.b16 %v102
      %v183 = vunpack.c.l.b16 %v103
      %v184 = vunpack.c.l.b16 %v104
      %v185 = vunpack.c.l.b16 %v105
      %v186 = vunpack.c.l.b16 %v106
      %v187 = vunpack.c.l.b16 %v107
      %v188 = vunpack.c.l.b16 %v108
      %v189 = vunpack.c.l.b16 %v109
      %v190 = vpack.c.b16 %v175, %v174
      %v191 = vpack.c.b16 %v177, %v176
      %v192 = vpack.c.b16 %v179, %v178
      %v193 = vpack.c.b16 %v181, %v180
      %v194 = vpack.c.b16 %v183, %v182
      %v195 = vpack.c.b16 %v185, %v184
      %v196 = vpack.c.b16 %v187, %v186
      %v197 = vpack.c.b16 %v189, %v188
      %206 = vmatprep.subr.bf16.mxu0 0
      %207 = vmatpush1.bf16.msra.mxu0 %v190
      %208 = vmatprep.subr.bf16.mxu0 0
      %209 = vmatpush1.bf16.msra.mxu0 %v191
      %210 = vmatprep.subr.bf16.mxu0 0
      %211 = vmatpush1.bf16.msra.mxu0 %v192
      %212 = vmatprep.subr.bf16.mxu0 0
      %213 = vmatpush1.bf16.msra.mxu0 %v193
      %214 = vmatprep.subr.bf16.mxu0 0
      %215 = vmatpush1.bf16.msra.mxu0 %v194
      %216 = vmatprep.subr.bf16.mxu0 0
      %217 = vmatpush1.bf16.msra.mxu0 %v195
      %218 = vmatprep.subr.bf16.mxu0 0
      %219 = vmatpush1.bf16.msra.mxu0 %v196
      %220 = vmatprep.subr.bf16.mxu0 0
      %221 = vmatpush1.bf16.msra.mxu0 %v197
      %222 = vmatprep.subr.bf16.mxu0 0
      %223 = vmatpush1.bf16.msra.mxu0 0
      %224 = vmatprep.subr.bf16.mxu0 0
      %225 = vmatpush1.bf16.msra.mxu0 0
      %226 = vmatprep.subr.bf16.mxu0 0
      %227 = vmatpush1.bf16.msra.mxu0 0
      %228 = vmatprep.subr.bf16.mxu0 0
      %229 = vmatpush1.bf16.msra.mxu0 0
      %230 = vmatprep.subr.bf16.mxu0 0
      %231 = vmatpush1.bf16.msra.mxu0 0
      %232 = vmatprep.subr.bf16.mxu0 0
      %233 = vmatpush1.bf16.msra.mxu0 0
      %234 = vmatprep.subr.bf16.mxu0 0
      %235 = vmatpush1.bf16.msra.mxu0 0
      %236 = vmatprep.subr.bf16.mxu0 0
      %237 = vmatpush1.bf16.msra.mxu0 0
      %238 = vmatprep.mubr.bf16.mxu0 0
      %239 = vmatmul.mubr.bf16.gmra.mrb[0].mxu0 %v142
      %v240 = vpop.f32.mrb[0].mxu0
      %v241 = vadd.f32 0.0, %v240
      %v242 = vpop.f32.mrb[0].mxu0
      %v243 = vpop.f32.mrb[0].mxu0
      %v244 = vadd.f32 0.0, %v243
      %v245 = vpop.f32.mrb[0].mxu0
      %246 = vmatprep.mubr.bf16.mxu0 0
      %247 = vmatmul.mubr.bf16.gmra.mrb[0].mxu0 %v143
      %v248 = vpop.f32.mrb[0].mxu0
      %v249 = vadd.f32 0.0, %v248
      %v250 = vpop.f32.mrb[0].mxu0
      %v251 = vpop.f32.mrb[0].mxu0
      %v252 = vadd.f32 0.0, %v251
      %v253 = vpop.f32.mrb[0].mxu0
      %254 = vmatprep.mubr.bf16.mxu0 0
      %255 = vmatmul.mubr.bf16.gmra.mrb[0].mxu0 %v144
      %v256 = vpop.f32.mrb[0].mxu0
      %v257 = vadd.f32 0.0, %v256
      %v258 = vpop.f32.mrb[0].mxu0
      %v259 = vpop.f32.mrb[0].mxu0
      %v260 = vadd.f32 0.0, %v259
      %v261 = vpop.f32.mrb[0].mxu0
      %262 = vmatprep.mubr.bf16.mxu0 0
      %263 = vmatmul.mubr.bf16.gmra.mrb[0].mxu0 %v145
      %v264 = vpop.f32.mrb[0].mxu0
      %v265 = vadd.f32 0.0, %v264
      %v266 = vpop.f32.mrb[0].mxu0
      %v267 = vpop.f32.mrb[0].mxu0
      %v268 = vadd.f32 0.0, %v267
      %v269 = vpop.f32.mrb[0].mxu0
      %270 = vmatprep.mubr.bf16.mxu0 0
      %271 = vmatmul.mubr.bf16.gmra.mrb[0].mxu0 %v146
      %v272 = vpop.f32.mrb[0].mxu0
      %v273 = vadd.f32 0.0, %v272
      %v274 = vpop.f32.mrb[0].mxu0
      %v275 = vpop.f32.mrb[0].mxu0
      %v276 = vadd.f32 0.0, %v275
      %v277 = vpop.f32.mrb[0].mxu0
      %278 = vmatprep.mubr.bf16.mxu0 0
      %279 = vmatmul.mubr.bf16.gmra.mrb[0].mxu0 %v147
      %v280 = vpop.f32.mrb[0].mxu0
      %v281 = vadd.f32 0.0, %v280
      %v282 = vpop.f32.mrb[0].mxu0
      %v283 = vpop.f32.mrb[0].mxu0
      %v284 = vadd.f32 0.0, %v283
      %v285 = vpop.f32.mrb[0].mxu0
      %286 = vmatprep.mubr.bf16.mxu0 0
      %287 = vmatmul.mubr.bf16.gmra.mrb[0].mxu0 %v148
      %v288 = vpop.f32.mrb[0].mxu0
      %v289 = vadd.f32 0.0, %v288
      %v290 = vpop.f32.mrb[0].mxu0
      %v291 = vpop.f32.mrb[0].mxu0
      %v292 = vadd.f32 0.0, %v291
      %v293 = vpop.f32.mrb[0].mxu0
      %294 = vmatprep.mubr.bf16.mxu0 0
      %295 = vmatmul.mubr.bf16.gmra.mrb[0].mxu0 %v149
      %v296 = vpop.f32.mrb[0].mxu0
      %v297 = vadd.f32 0.0, %v296
      %v298 = vpop.f32.mrb[0].mxu0
      %v299 = vpop.f32.mrb[0].mxu0
      %v300 = vadd.f32 0.0, %v299
      %v301 = vpop.f32.mrb[0].mxu0
      %302 = vdwg.mxu0
      %v303 = vld [vmem:[%s3] sm:$0xff]
      %v304 = vld [vmem:[%s3 + $0x8] sm:$0xff]
      %v305 = vld [vmem:[%s3 + $0x10] sm:$0xff]
      %v306 = vld [vmem:[%s3 + $0x18] sm:$0xff]
      %v307 = vld [vmem:[%s3 + $0x20] sm:$0xff]
      %v308 = vld [vmem:[%s3 + $0x28] sm:$0xff]
      %v309 = vld [vmem:[%s3 + $0x30] sm:$0xff]
      %v310 = vld [vmem:[%s3 + $0x38] sm:$0xff]
      %v311 = vld [vmem:[%s3 + $0x40] sm:$0xff]
      %v312 = vld [vmem:[%s3 + $0x48] sm:$0xff]
      %v313 = vld [vmem:[%s3 + $0x50] sm:$0xff]
      %v314 = vld [vmem:[%s3 + $0x58] sm:$0xff]
      %v315 = vld [vmem:[%s3 + $0x60] sm:$0xff]
      %v316 = vld [vmem:[%s3 + $0x68] sm:$0xff]
      %v317 = vld [vmem:[%s3 + $0x70] sm:$0xff]
      %v318 = vld [vmem:[%s3 + $0x78] sm:$0xff]
      %320 = vset.pattern.permute.xlu0 0
      %321 = vperm.xlu0 %320, %v303
      %v322 = vpop.permute.xlu0 %321
      %325 = vset.pattern.permute.xlu0 0
      %326 = vperm.xlu0 %325, %v304
      %v327 = vpop.permute.xlu0 %326
      %330 = vset.pattern.permute.xlu0 0
      %331 = vperm.xlu0 %330, %v305
      %v332 = vpop.permute.xlu0 %331
      %335 = vset.pattern.permute.xlu0 0
      %336 = vperm.xlu0 %335, %v306
      %v337 = vpop.permute.xlu0 %336
      %340 = vset.pattern.permute.xlu0 0
      %341 = vperm.xlu0 %340, %v307
      %v342 = vpop.permute.xlu0 %341
      %345 = vset.pattern.permute.xlu0 0
      %346 = vperm.xlu0 %345, %v308
      %v347 = vpop.permute.xlu0 %346
      %350 = vset.pattern.permute.xlu0 0
      %351 = vperm.xlu0 %350, %v309
      %v352 = vpop.permute.xlu0 %351
      %355 = vset.pattern.permute.xlu0 0
      %356 = vperm.xlu0 %355, %v310
      %v357 = vpop.permute.xlu0 %356
      %360 = vset.pattern.permute.xlu0 0
      %361 = vperm.xlu0 %360, %v311
      %v362 = vpop.permute.xlu0 %361
      %365 = vset.pattern.permute.xlu0 0
      %366 = vperm.xlu0 %365, %v312
      %v367 = vpop.permute.xlu0 %366
      %370 = vset.pattern.permute.xlu0 0
      %371 = vperm.xlu0 %370, %v313
      %v372 = vpop.permute.xlu0 %371
      %375 = vset.pattern.permute.xlu0 0
      %376 = vperm.xlu0 %375, %v314
      %v377 = vpop.permute.xlu0 %376
      %380 = vset.pattern.permute.xlu0 0
      %381 = vperm.xlu0 %380, %v315
      %v382 = vpop.permute.xlu0 %381
      %385 = vset.pattern.permute.xlu0 0
      %386 = vperm.xlu0 %385, %v316
      %v387 = vpop.permute.xlu0 %386
      %390 = vset.pattern.permute.xlu0 0
      %391 = vperm.xlu0 %390, %v317
      %v392 = vpop.permute.xlu0 %391
      %395 = vset.pattern.permute.xlu0 0
      %396 = vperm.xlu0 %395, %v318
      %v397 = vpop.permute.xlu0 %396
      %v399 = vmul.f32 %v241, %v322
      %v400 = vmul.f32 %v244, %v327
      %v401 = vmul.f32 %v249, %v332
      %v402 = vmul.f32 %v252, %v337
      %v403 = vmul.f32 %v257, %v342
      %v404 = vmul.f32 %v260, %v347
      %v405 = vmul.f32 %v265, %v352
      %v406 = vmul.f32 %v268, %v357
      %v407 = vmul.f32 %v273, %v362
      %v408 = vmul.f32 %v276, %v367
      %v409 = vmul.f32 %v281, %v372
      %v410 = vmul.f32 %v284, %v377
      %v411 = vmul.f32 %v289, %v382
      %v412 = vmul.f32 %v292, %v387
      %v413 = vmul.f32 %v297, %v392
      %v414 = vmul.f32 %v300, %v397
      %v415 = vld [vmem:[%s4] sm:$0x1]
      %v417 = vlaneseq
      %v418 = vshrl.u32 %v417, 7
      %v419 = vsub.s32 0, %v418
      %v420 = vrot.slane %v415, %v419
      %v422 = vmul.f32 %v399, %v420
      %v423 = vmul.f32 %v400, %v420
      %v424 = vmul.f32 %v401, %v420
      %v425 = vmul.f32 %v402, %v420
      %v426 = vmul.f32 %v403, %v420
      %v427 = vmul.f32 %v404, %v420
      %v428 = vmul.f32 %v405, %v420
      %v429 = vmul.f32 %v406, %v420
      %v430 = vmul.f32 %v407, %v420
      %v431 = vmul.f32 %v408, %v420
      %v432 = vmul.f32 %v409, %v420
      %v433 = vmul.f32 %v410, %v420
      %v434 = vmul.f32 %v411, %v420
      %v435 = vmul.f32 %v412, %v420
      %v436 = vmul.f32 %v413, %v420
      %v437 = vmul.f32 %v414, %v420
      %v438 = vmax.f32 %v422, -0.99999
      %v439 = vmax.f32 %v423, -0.99999
      %v440 = vmax.f32 %v424, -0.99999
      %v441 = vmax.f32 %v425, -0.99999
      %v442 = vmax.f32 %v426, -0.99999
      %v443 = vmax.f32 %v427, -0.99999
      %v444 = vmax.f32 %v428, -0.99999
      %v445 = vmax.f32 %v429, -0.99999
      %v446 = vmax.f32 %v430, -0.99999
      %v447 = vmax.f32 %v431, -0.99999
      %v448 = vmax.f32 %v432, -0.99999
      %v449 = vmax.f32 %v433, -0.99999
      %v450 = vmax.f32 %v434, -0.99999
      %v451 = vmax.f32 %v435, -0.99999
      %v452 = vmax.f32 %v436, -0.99999
      %v453 = vmax.f32 %v437, -0.99999
      %v454 = vmin.f32 %v438, 0.99999
      %v455 = vmin.f32 %v439, 0.99999
      %v456 = vmin.f32 %v440, 0.99999
      %v457 = vmin.f32 %v441, 0.99999
      %v458 = vmin.f32 %v442, 0.99999
      %v459 = vmin.f32 %v443, 0.99999
      %v460 = vmin.f32 %v444, 0.99999
      %v461 = vmin.f32 %v445, 0.99999
      %v462 = vmin.f32 %v446, 0.99999
      %v463 = vmin.f32 %v447, 0.99999
      %v464 = vmin.f32 %v448, 0.99999
      %v465 = vmin.f32 %v449, 0.99999
      %v466 = vmin.f32 %v450, 0.99999
      %v467 = vmin.f32 %v451, 0.99999
      %v468 = vmin.f32 %v452, 0.99999
      %v469 = vmin.f32 %v453, 0.99999
      %v470 = vand.u32 2147483647, %v454
      %v471 = vand.u32 2147483647, %v455
      %v472 = vand.u32 2147483647, %v456
      %v473 = vand.u32 2147483647, %v457
      %v474 = vand.u32 2147483647, %v458
      %v475 = vand.u32 2147483647, %v459
      %v476 = vand.u32 2147483647, %v460
      %v477 = vand.u32 2147483647, %v461
      %v478 = vand.u32 2147483647, %v462
      %v479 = vand.u32 2147483647, %v463
      %v480 = vand.u32 2147483647, %v464
      %v481 = vand.u32 2147483647, %v465
      %v482 = vand.u32 2147483647, %v466
      %v483 = vand.u32 2147483647, %v467
      %v484 = vand.u32 2147483647, %v468
      %v485 = vand.u32 2147483647, %v469
      %v486 = vmul.f32 %v470, -0.0059617213
      %v487 = vmul.f32 %v471, -0.0059617213
      %v488 = vmul.f32 %v472, -0.0059617213
      %v489 = vmul.f32 %v473, -0.0059617213
      %v490 = vmul.f32 %v474, -0.0059617213
      %v491 = vmul.f32 %v475, -0.0059617213
      %v492 = vmul.f32 %v476, -0.0059617213
      %v493 = vmul.f32 %v477, -0.0059617213
      %v494 = vmul.f32 %v478, -0.0059617213
      %v495 = vmul.f32 %v479, -0.0059617213
      %v496 = vmul.f32 %v480, -0.0059617213
      %v497 = vmul.f32 %v481, -0.0059617213
      %v498 = vmul.f32 %v482, -0.0059617213
      %v499 = vmul.f32 %v483, -0.0059617213
      %v500 = vmul.f32 %v484, -0.0059617213
      %v501 = vmul.f32 %v485, -0.0059617213
      %v502 = vadd.f32 %v486, 0.02363801
      %v503 = vadd.f32 %v487, 0.02363801
      %v504 = vadd.f32 %v488, 0.02363801
      %v505 = vadd.f32 %v489, 0.02363801
      %v506 = vadd.f32 %v490, 0.02363801
      %v507 = vadd.f32 %v491, 0.02363801
      %v508 = vadd.f32 %v492, 0.02363801
      %v509 = vadd.f32 %v493, 0.02363801
      %v510 = vadd.f32 %v494, 0.02363801
      %v511 = vadd.f32 %v495, 0.02363801
      %v512 = vadd.f32 %v496, 0.02363801
      %v513 = vadd.f32 %v497, 0.02363801
      %v514 = vadd.f32 %v498, 0.02363801
      %v515 = vadd.f32 %v499, 0.02363801
      %v516 = vadd.f32 %v500, 0.02363801
      %v517 = vadd.f32 %v501, 0.02363801
      %v518 = vmul.f32 %v502, %v470
      %v519 = vmul.f32 %v503, %v471
      %v520 = vmul.f32 %v504, %v472
      %v521 = vmul.f32 %v505, %v473
      %v522 = vmul.f32 %v506, %v474
      %v523 = vmul.f32 %v507, %v475
      %v524 = vmul.f32 %v508, %v476
      %v525 = vmul.f32 %v509, %v477
      %v526 = vmul.f32 %v510, %v478
      %v527 = vmul.f32 %v511, %v479
      %v528 = vmul.f32 %v512, %v480
      %v529 = vmul.f32 %v513, %v481
      %v530 = vmul.f32 %v514, %v482
      %v531 = vmul.f32 %v515, %v483
      %v532 = vmul.f32 %v516, %v484
      %v533 = vmul.f32 %v517, %v485
      %v534 = vadd.f32 %v518, -0.06751811
      %v535 = vadd.f32 %v519, -0.06751811
      %v536 = vadd.f32 %v520, -0.06751811
      %v537 = vadd.f32 %v521, -0.06751811
      %v538 = vadd.f32 %v522, -0.06751811
      %v539 = vadd.f32 %v523, -0.06751811
      %v540 = vadd.f32 %v524, -0.06751811
      %v541 = vadd.f32 %v525, -0.06751811
      %v542 = vadd.f32 %v526, -0.06751811
      %v543 = vadd.f32 %v527, -0.06751811
      %v544 = vadd.f32 %v528, -0.06751811
      %v545 = vadd.f32 %v529, -0.06751811
      %v546 = vadd.f32 %v530, -0.06751811
      %v547 = vadd.f32 %v531, -0.06751811
      %v548 = vadd.f32 %v532, -0.06751811
      %v549 = vadd.f32 %v533, -0.06751811
      %v550 = vmul.f32 %v534, %v470
      %v551 = vmul.f32 %v535, %v471
      %v552 = vmul.f32 %v536, %v472
      %v553 = vmul.f32 %v537, %v473
      %v554 = vmul.f32 %v538, %v474
      %v555 = vmul.f32 %v539, %v475
      %v556 = vmul.f32 %v540, %v476
      %v557 = vmul.f32 %v541, %v477
      %v558 = vmul.f32 %v542, %v478
      %v559 = vmul.f32 %v543, %v479
      %v560 = vmul.f32 %v544, %v480
      %v561 = vmul.f32 %v545, %v481
      %v562 = vmul.f32 %v546, %v482
      %v563 = vmul.f32 %v547, %v483
      %v564 = vmul.f32 %v548, %v484
      %v565 = vmul.f32 %v549, %v485
      %v566 = vadd.f32 %v550, 0.4999785
      %v567 = vadd.f32 %v551, 0.4999785
      %v568 = vadd.f32 %v552, 0.4999785
      %v569 = vadd.f32 %v553, 0.4999785
      %v570 = vadd.f32 %v554, 0.4999785
      %v571 = vadd.f32 %v555, 0.4999785
      %v572 = vadd.f32 %v556, 0.4999785
      %v573 = vadd.f32 %v557, 0.4999785
      %v574 = vadd.f32 %v558, 0.4999785
      %v575 = vadd.f32 %v559, 0.4999785
      %v576 = vadd.f32 %v560, 0.4999785
      %v577 = vadd.f32 %v561, 0.4999785
      %v578 = vadd.f32 %v562, 0.4999785
      %v579 = vadd.f32 %v563, 0.4999785
      %v580 = vadd.f32 %v564, 0.4999785
      %v581 = vadd.f32 %v565, 0.4999785
      %v582 = vsub.f32 1.0, %v470
      %v583 = vsub.f32 1.0, %v471
      %v584 = vsub.f32 1.0, %v472
      %v585 = vsub.f32 1.0, %v473
      %v586 = vsub.f32 1.0, %v474
      %v587 = vsub.f32 1.0, %v475
      %v588 = vsub.f32 1.0, %v476
      %v589 = vsub.f32 1.0, %v477
      %v590 = vsub.f32 1.0, %v478
      %v591 = vsub.f32 1.0, %v479
      %v592 = vsub.f32 1.0, %v480
      %v593 = vsub.f32 1.0, %v481
      %v594 = vsub.f32 1.0, %v482
      %v595 = vsub.f32 1.0, %v483
      %v596 = vsub.f32 1.0, %v484
      %v597 = vsub.f32 1.0, %v485
      %v598 = vmax.f32 %v582, 0.0
      %v599 = vmax.f32 %v583, 0.0
      %v600 = vmax.f32 %v584, 0.0
      %v601 = vmax.f32 %v585, 0.0
      %v602 = vmax.f32 %v586, 0.0
      %v603 = vmax.f32 %v587, 0.0
      %v604 = vmax.f32 %v588, 0.0
      %v605 = vmax.f32 %v589, 0.0
      %v606 = vmax.f32 %v590, 0.0
      %v607 = vmax.f32 %v591, 0.0
      %v608 = vmax.f32 %v592, 0.0
      %v609 = vmax.f32 %v593, 0.0
      %v610 = vmax.f32 %v594, 0.0
      %v611 = vmax.f32 %v595, 0.0
      %v612 = vmax.f32 %v596, 0.0
      %v613 = vmax.f32 %v597, 0.0
      %v614 = vrsqrt.pop %v598
      %v615 = vmul.f32 %v598, %v614
      %vm616 = vcmp.eq.f32.partialorder %v598, inf
      %v617 = vsel %vm616, %v598, %v615
      %vm618 = vcmp.eq.f32.partialorder %v598, 0.0
      %v619 = vand.u32 %v598, 2147483648
      %v620 = vsel %vm618, %v619, %v617
      %v621 = vrsqrt.pop %v599
      %v622 = vmul.f32 %v599, %v621
      %vm623 = vcmp.eq.f32.partialorder %v599, inf
      %v624 = vsel %vm623, %v599, %v622
      %vm625 = vcmp.eq.f32.partialorder %v599, 0.0
      %v626 = vand.u32 %v599, 2147483648
      %v627 = vsel %vm625, %v626, %v624
      %v628 = vrsqrt.pop %v600
      %v629 = vmul.f32 %v600, %v628
      %vm630 = vcmp.eq.f32.partialorder %v600, inf
      %v631 = vsel %vm630, %v600, %v629
      %vm632 = vcmp.eq.f32.partialorder %v600, 0.0
      %v633 = vand.u32 %v600, 2147483648
      %v634 = vsel %vm632, %v633, %v631
      %v635 = vrsqrt.pop %v601
      %v636 = vmul.f32 %v601, %v635
      %vm637 = vcmp.eq.f32.partialorder %v601, inf
      %v638 = vsel %vm637, %v601, %v636
      %vm639 = vcmp.eq.f32.partialorder %v601, 0.0
      %v640 = vand.u32 %v601, 2147483648
      %v641 = vsel %vm639, %v640, %v638
      %v642 = vrsqrt.pop %v602
      %v643 = vmul.f32 %v602, %v642
      %vm644 = vcmp.eq.f32.partialorder %v602, inf
      %v645 = vsel %vm644, %v602, %v643
      %vm646 = vcmp.eq.f32.partialorder %v602, 0.0
      %v647 = vand.u32 %v602, 2147483648
      %v648 = vsel %vm646, %v647, %v645
      %v649 = vrsqrt.pop %v603
      %v650 = vmul.f32 %v603, %v649
      %vm651 = vcmp.eq.f32.partialorder %v603, inf
      %v652 = vsel %vm651, %v603, %v650
      %vm653 = vcmp.eq.f32.partialorder %v603, 0.0
      %v654 = vand.u32 %v603, 2147483648
      %v655 = vsel %vm653, %v654, %v652
      %v656 = vrsqrt.pop %v604
      %v657 = vmul.f32 %v604, %v656
      %vm658 = vcmp.eq.f32.partialorder %v604, inf
      %v659 = vsel %vm658, %v604, %v657
      %vm660 = vcmp.eq.f32.partialorder %v604, 0.0
      %v661 = vand.u32 %v604, 2147483648
      %v662 = vsel %vm660, %v661, %v659
      %v663 = vrsqrt.pop %v605
      %v664 = vmul.f32 %v605, %v663
      %vm665 = vcmp.eq.f32.partialorder %v605, inf
      %v666 = vsel %vm665, %v605, %v664
      %vm667 = vcmp.eq.f32.partialorder %v605, 0.0
      %v668 = vand.u32 %v605, 2147483648
      %v669 = vsel %vm667, %v668, %v666
      %v670 = vrsqrt.pop %v606
      %v671 = vmul.f32 %v606, %v670
      %vm672 = vcmp.eq.f32.partialorder %v606, inf
      %v673 = vsel %vm672, %v606, %v671
      %vm674 = vcmp.eq.f32.partialorder %v606, 0.0
      %v675 = vand.u32 %v606, 2147483648
      %v676 = vsel %vm674, %v675, %v673
      %v677 = vrsqrt.pop %v607
      %v678 = vmul.f32 %v607, %v677
      %vm679 = vcmp.eq.f32.partialorder %v607, inf
      %v680 = vsel %vm679, %v607, %v678
      %vm681 = vcmp.eq.f32.partialorder %v607, 0.0
      %v682 = vand.u32 %v607, 2147483648
      %v683 = vsel %vm681, %v682, %v680
      %v684 = vrsqrt.pop %v608
      %v685 = vmul.f32 %v608, %v684
      %vm686 = vcmp.eq.f32.partialorder %v608, inf
      %v687 = vsel %vm686, %v608, %v685
      %vm688 = vcmp.eq.f32.partialorder %v608, 0.0
      %v689 = vand.u32 %v608, 2147483648
      %v690 = vsel %vm688, %v689, %v687
      %v691 = vrsqrt.pop %v609
      %v692 = vmul.f32 %v609, %v691
      %vm693 = vcmp.eq.f32.partialorder %v609, inf
      %v694 = vsel %vm693, %v609, %v692
      %vm695 = vcmp.eq.f32.partialorder %v609, 0.0
      %v696 = vand.u32 %v609, 2147483648
      %v697 = vsel %vm695, %v696, %v694
      %v698 = vrsqrt.pop %v610
      %v699 = vmul.f32 %v610, %v698
      %vm700 = vcmp.eq.f32.partialorder %v610, inf
      %v701 = vsel %vm700, %v610, %v699
      %vm702 = vcmp.eq.f32.partialorder %v610, 0.0
      %v703 = vand.u32 %v610, 2147483648
      %v704 = vsel %vm702, %v703, %v701
      %v705 = vrsqrt.pop %v611
      %v706 = vmul.f32 %v611, %v705
      %vm707 = vcmp.eq.f32.partialorder %v611, inf
      %v708 = vsel %vm707, %v611, %v706
      %vm709 = vcmp.eq.f32.partialorder %v611, 0.0
      %v710 = vand.u32 %v611, 2147483648
      %v711 = vsel %vm709, %v710, %v708
      %v712 = vrsqrt.pop %v612
      %v713 = vmul.f32 %v612, %v712
      %vm714 = vcmp.eq.f32.partialorder %v612, inf
      %v715 = vsel %vm714, %v612, %v713
      %vm716 = vcmp.eq.f32.partialorder %v612, 0.0
      %v717 = vand.u32 %v612, 2147483648
      %v718 = vsel %vm716, %v717, %v715
      %v719 = vrsqrt.pop %v613
      %v720 = vmul.f32 %v613, %v719
      %vm721 = vcmp.eq.f32.partialorder %v613, inf
      %v722 = vsel %vm721, %v613, %v720
      %vm723 = vcmp.eq.f32.partialorder %v613, 0.0
      %v724 = vand.u32 %v613, 2147483648
      %v725 = vsel %vm723, %v724, %v722
      %v726 = vmul.f32 %v620, %v566
      %v727 = vmul.f32 %v627, %v567
      %v728 = vmul.f32 %v634, %v568
      %v729 = vmul.f32 %v641, %v569
      %v730 = vmul.f32 %v648, %v570
      %v731 = vmul.f32 %v655, %v571
      %v732 = vmul.f32 %v662, %v572
      %v733 = vmul.f32 %v669, %v573
      %v734 = vmul.f32 %v676, %v574
      %v735 = vmul.f32 %v683, %v575
      %v736 = vmul.f32 %v690, %v576
      %v737 = vmul.f32 %v697, %v577
      %v738 = vmul.f32 %v704, %v578
      %v739 = vmul.f32 %v711, %v579
      %v740 = vmul.f32 %v718, %v580
      %v741 = vmul.f32 %v725, %v581
      %vm742 = vcmp.lt.f32.partialorder %v454, 0.0
      %vm743 = vcmp.lt.f32.partialorder %v455, 0.0
      %vm744 = vcmp.lt.f32.partialorder %v456, 0.0
      %vm745 = vcmp.lt.f32.partialorder %v457, 0.0
      %vm746 = vcmp.lt.f32.partialorder %v458, 0.0
      %vm747 = vcmp.lt.f32.partialorder %v459, 0.0
      %vm748 = vcmp.lt.f32.partialorder %v460, 0.0
      %vm749 = vcmp.lt.f32.partialorder %v461, 0.0
      %vm750 = vcmp.lt.f32.partialorder %v462, 0.0
      %vm751 = vcmp.lt.f32.partialorder %v463, 0.0
      %vm752 = vcmp.lt.f32.partialorder %v464, 0.0
      %vm753 = vcmp.lt.f32.partialorder %v465, 0.0
      %vm754 = vcmp.lt.f32.partialorder %v466, 0.0
      %vm755 = vcmp.lt.f32.partialorder %v467, 0.0
      %vm756 = vcmp.lt.f32.partialorder %v468, 0.0
      %vm757 = vcmp.lt.f32.partialorder %v469, 0.0
      %v758 = vsub.f32 1.0, %v726
      %v759 = vsub.f32 1.0, %v727
      %v760 = vsub.f32 1.0, %v728
      %v761 = vsub.f32 1.0, %v729
      %v762 = vsub.f32 1.0, %v730
      %v763 = vsub.f32 1.0, %v731
      %v764 = vsub.f32 1.0, %v732
      %v765 = vsub.f32 1.0, %v733
      %v766 = vsub.f32 1.0, %v734
      %v767 = vsub.f32 1.0, %v735
      %v768 = vsub.f32 1.0, %v736
      %v769 = vsub.f32 1.0, %v737
      %v770 = vsub.f32 1.0, %v738
      %v771 = vsub.f32 1.0, %v739
      %v772 = vsub.f32 1.0, %v740
      %v773 = vsub.f32 1.0, %v741
      %v774 = vsel %vm742, %v726, %v758
      %v775 = vsel %vm743, %v727, %v759
      %v776 = vsel %vm744, %v728, %v760
      %v777 = vsel %vm745, %v729, %v761
      %v778 = vsel %vm746, %v730, %v762
      %v779 = vsel %vm747, %v731, %v763
      %v780 = vsel %vm748, %v732, %v764
      %v781 = vsel %vm749, %v733, %v765
      %v782 = vsel %vm750, %v734, %v766
      %v783 = vsel %vm751, %v735, %v767
      %v784 = vsel %vm752, %v736, %v768
      %v785 = vsel %vm753, %v737, %v769
      %v786 = vsel %vm754, %v738, %v770
      %v787 = vsel %vm755, %v739, %v771
      %v788 = vsel %vm756, %v740, %v772
      %v789 = vsel %vm757, %v741, %v773
      %v790 = vld [vmem:[%s5] sm:$0xff]
      %v791 = vld [vmem:[%s5 + $0x8] sm:$0xff]
      %v792 = vld [vmem:[%s5 + $0x10] sm:$0xff]
      %v793 = vld [vmem:[%s5 + $0x18] sm:$0xff]
      %v794 = vld [vmem:[%s5 + $0x20] sm:$0xff]
      %v795 = vld [vmem:[%s5 + $0x28] sm:$0xff]
      %v796 = vld [vmem:[%s5 + $0x30] sm:$0xff]
      %v797 = vld [vmem:[%s5 + $0x38] sm:$0xff]
      %v798 = vld [vmem:[%s5 + $0x40] sm:$0xff]
      %v799 = vld [vmem:[%s5 + $0x48] sm:$0xff]
      %v800 = vld [vmem:[%s5 + $0x50] sm:$0xff]
      %v801 = vld [vmem:[%s5 + $0x58] sm:$0xff]
      %v802 = vld [vmem:[%s5 + $0x60] sm:$0xff]
      %v803 = vld [vmem:[%s5 + $0x68] sm:$0xff]
      %v804 = vld [vmem:[%s5 + $0x70] sm:$0xff]
      %v805 = vld [vmem:[%s5 + $0x78] sm:$0xff]
      %v806 = vld [vmem:[%s6] sm:$0x1]
      %807 = vset.pattern.permute.xlu0 0
      %808 = vperm.xlu0 %807, %v790
      %v809 = vpop.permute.xlu0 %808
      %810 = vset.pattern.permute.xlu0 0
      %811 = vperm.xlu0 %810, %v791
      %v812 = vpop.permute.xlu0 %811
      %813 = vset.pattern.permute.xlu0 0
      %814 = vperm.xlu0 %813, %v792
      %v815 = vpop.permute.xlu0 %814
      %816 = vset.pattern.permute.xlu0 0
      %817 = vperm.xlu0 %816, %v793
      %v818 = vpop.permute.xlu0 %817
      %819 = vset.pattern.permute.xlu0 0
      %820 = vperm.xlu0 %819, %v794
      %v821 = vpop.permute.xlu0 %820
      %822 = vset.pattern.permute.xlu0 0
      %823 = vperm.xlu0 %822, %v795
      %v824 = vpop.permute.xlu0 %823
      %825 = vset.pattern.permute.xlu0 0
      %826 = vperm.xlu0 %825, %v796
      %v827 = vpop.permute.xlu0 %826
      %828 = vset.pattern.permute.xlu0 0
      %829 = vperm.xlu0 %828, %v797
      %v830 = vpop.permute.xlu0 %829
      %831 = vset.pattern.permute.xlu0 0
      %832 = vperm.xlu0 %831, %v798
      %v833 = vpop.permute.xlu0 %832
      %834 = vset.pattern.permute.xlu0 0
      %835 = vperm.xlu0 %834, %v799
      %v836 = vpop.permute.xlu0 %835
      %837 = vset.pattern.permute.xlu0 0
      %838 = vperm.xlu0 %837, %v800
      %v839 = vpop.permute.xlu0 %838
      %840 = vset.pattern.permute.xlu0 0
      %841 = vperm.xlu0 %840, %v801
      %v842 = vpop.permute.xlu0 %841
      %843 = vset.pattern.permute.xlu0 0
      %844 = vperm.xlu0 %843, %v802
      %v845 = vpop.permute.xlu0 %844
      %846 = vset.pattern.permute.xlu0 0
      %847 = vperm.xlu0 %846, %v803
      %v848 = vpop.permute.xlu0 %847
      %849 = vset.pattern.permute.xlu0 0
      %850 = vperm.xlu0 %849, %v804
      %v851 = vpop.permute.xlu0 %850
      %852 = vset.pattern.permute.xlu0 0
      %853 = vperm.xlu0 %852, %v805
      %v854 = vpop.permute.xlu0 %853
      %v855 = vlaneseq
      %v856 = vshrl.u32 %v855, 7
      %v857 = vsub.s32 0, %v856
      %v858 = vrot.slane %v806, %v857
      %vm859 = vcmp.eq.s32.totalorder %v809, %v858
      %vm860 = vcmp.eq.s32.totalorder %v812, %v858
      %vm861 = vcmp.eq.s32.totalorder %v815, %v858
      %vm862 = vcmp.eq.s32.totalorder %v818, %v858
      %vm863 = vcmp.eq.s32.totalorder %v821, %v858
      %vm864 = vcmp.eq.s32.totalorder %v824, %v858
      %vm865 = vcmp.eq.s32.totalorder %v827, %v858
      %vm866 = vcmp.eq.s32.totalorder %v830, %v858
      %vm867 = vcmp.eq.s32.totalorder %v833, %v858
      %vm868 = vcmp.eq.s32.totalorder %v836, %v858
      %vm869 = vcmp.eq.s32.totalorder %v839, %v858
      %vm870 = vcmp.eq.s32.totalorder %v842, %v858
      %vm871 = vcmp.eq.s32.totalorder %v845, %v858
      %vm872 = vcmp.eq.s32.totalorder %v848, %v858
      %vm873 = vcmp.eq.s32.totalorder %v851, %v858
      %vm874 = vcmp.eq.s32.totalorder %v854, %v858
      %v875 = vsel %vm859, %v774, 0.0
      %v876 = vsel %vm860, %v775, 0.0
      %v877 = vsel %vm861, %v776, 0.0
      %v878 = vsel %vm862, %v777, 0.0
      %v879 = vsel %vm863, %v778, 0.0
      %v880 = vsel %vm864, %v779, 0.0
      %v881 = vsel %vm865, %v780, 0.0
      %v882 = vsel %vm866, %v781, 0.0
      %v883 = vsel %vm867, %v782, 0.0
      %v884 = vsel %vm868, %v783, 0.0
      %v885 = vsel %vm869, %v784, 0.0
      %v886 = vsel %vm870, %v785, 0.0
      %v887 = vsel %vm871, %v786, 0.0
      %v888 = vsel %vm872, %v787, 0.0
      %v889 = vsel %vm873, %v788, 0.0
      %v890 = vsel %vm874, %v789, 0.0
      %v891 = vpack.c.bf16 %v876, %v875
      %v892 = vpack.c.bf16 %v878, %v877
      %v893 = vpack.c.bf16 %v880, %v879
      %v894 = vpack.c.bf16 %v882, %v881
      %v895 = vpack.c.bf16 %v884, %v883
      %v896 = vpack.c.bf16 %v886, %v885
      %v897 = vpack.c.bf16 %v888, %v887
      %v898 = vpack.c.bf16 %v890, %v889
      %v907 = vunpack.c.l.b16 %v891
      %v908 = vunpack.c.h.b16 %v891
      %v909 = vunpack.c.l.b16 %v892
      %v910 = vunpack.c.h.b16 %v892
      %v911 = vunpack.c.l.b16 %v893
      %v912 = vunpack.c.h.b16 %v893
      %v913 = vunpack.c.l.b16 %v894
      %v914 = vunpack.c.h.b16 %v894
      %v915 = vunpack.c.l.b16 %v895
      %v916 = vunpack.c.h.b16 %v895
      %v917 = vunpack.c.l.b16 %v896
      %v918 = vunpack.c.h.b16 %v896
      %v919 = vunpack.c.l.b16 %v897
      %v920 = vunpack.c.h.b16 %v897
      %v921 = vunpack.c.l.b16 %v898
      %v922 = vunpack.c.h.b16 %v898
      %v923 = vpack.c.b16 %v907, %v907
      %v924 = vpack.c.b16 %v908, %v908
      %v925 = vpack.c.b16 %v909, %v909
      %v926 = vpack.c.b16 %v910, %v910
      %v927 = vpack.c.b16 %v911, %v911
      %v928 = vpack.c.b16 %v912, %v912
      %v929 = vpack.c.b16 %v913, %v913
      %v930 = vpack.c.b16 %v914, %v914
      %v931 = vpack.c.b16 %v915, %v915
      %v932 = vpack.c.b16 %v916, %v916
      %v933 = vpack.c.b16 %v917, %v917
      %v934 = vpack.c.b16 %v918, %v918
      %v935 = vpack.c.b16 %v919, %v919
      %v936 = vpack.c.b16 %v920, %v920
      %v937 = vpack.c.b16 %v921, %v921
      %v938 = vpack.c.b16 %v922, %v922
      %955 = vst [vmem:[#allocation4] sm:$0xf] %v923
      %956 = vst [vmem:[#allocation4 + $0x4] sm:$0xf] %v924
      %957 = vst [vmem:[#allocation4 + $0x8] sm:$0xf] %v925
      %958 = vst [vmem:[#allocation4 + $0xc] sm:$0xf] %v926
      %959 = vst [vmem:[#allocation4 + $0x10] sm:$0xf] %v927
      %960 = vst [vmem:[#allocation4 + $0x14] sm:$0xf] %v928
      %961 = vst [vmem:[#allocation4 + $0x18] sm:$0xf] %v929
      %962 = vst [vmem:[#allocation4 + $0x1c] sm:$0xf] %v930
      %963 = vst [vmem:[#allocation4 + $0x20] sm:$0xf] %v931
      %964 = vst [vmem:[#allocation4 + $0x24] sm:$0xf] %v932
      %965 = vst [vmem:[#allocation4 + $0x28] sm:$0xf] %v933
      %966 = vst [vmem:[#allocation4 + $0x2c] sm:$0xf] %v934
      %967 = vst [vmem:[#allocation4 + $0x30] sm:$0xf] %v935
      %968 = vst [vmem:[#allocation4 + $0x34] sm:$0xf] %v936
      %969 = vst [vmem:[#allocation4 + $0x38] sm:$0xf] %v937
      %970 = vst [vmem:[#allocation4 + $0x3c] sm:$0xf] %v938
      %v971 = vld [vmem:[%s8] sm:$0xff]
      %v972 = vld [vmem:[%s8 + $0x8] sm:$0xff]
      %v973 = vld [vmem:[%s8 + $0x10] sm:$0xff]
      %v974 = vld [vmem:[%s8 + $0x18] sm:$0xff]
      %v975 = vld [vmem:[%s8 + $0x20] sm:$0xff]
      %v976 = vld [vmem:[%s8 + $0x28] sm:$0xff]
      %v977 = vld [vmem:[%s8 + $0x30] sm:$0xff]
      %v978 = vld [vmem:[%s8 + $0x38] sm:$0xff]
      %v979 = vld [vmem:[%s8 + $0x40] sm:$0xff]
      %v980 = vld [vmem:[%s8 + $0x48] sm:$0xff]
      %v981 = vld [vmem:[%s8 + $0x50] sm:$0xff]
      %v982 = vld [vmem:[%s8 + $0x58] sm:$0xff]
      %v983 = vld [vmem:[%s8 + $0x60] sm:$0xff]
      %v984 = vld [vmem:[%s8 + $0x68] sm:$0xff]
      %v985 = vld [vmem:[%s8 + $0x70] sm:$0xff]
      %v986 = vld [vmem:[%s8 + $0x78] sm:$0xff]
      %987 = vadd.xlane.f32.xlu0 %v875
      %v988 = vpop.xlane.xlu0 %987
      %989 = vadd.xlane.f32.xlu0 %v876
      %v990 = vpop.xlane.xlu0 %989
      %991 = vadd.xlane.f32.xlu0 %v877
      %v992 = vpop.xlane.xlu0 %991
      %993 = vadd.xlane.f32.xlu0 %v878
      %v994 = vpop.xlane.xlu0 %993
      %995 = vadd.xlane.f32.xlu0 %v879
      %v996 = vpop.xlane.xlu0 %995
      %997 = vadd.xlane.f32.xlu0 %v880
      %v998 = vpop.xlane.xlu0 %997
      %999 = vadd.xlane.f32.xlu0 %v881
      %v1000 = vpop.xlane.xlu0 %999
      %1001 = vadd.xlane.f32.xlu0 %v882
      %v1002 = vpop.xlane.xlu0 %1001
      %1003 = vadd.xlane.f32.xlu0 %v883
      %v1004 = vpop.xlane.xlu0 %1003
      %1005 = vadd.xlane.f32.xlu0 %v884
      %v1006 = vpop.xlane.xlu0 %1005
      %1007 = vadd.xlane.f32.xlu0 %v885
      %v1008 = vpop.xlane.xlu0 %1007
      %1009 = vadd.xlane.f32.xlu0 %v886
      %v1010 = vpop.xlane.xlu0 %1009
      %1011 = vadd.xlane.f32.xlu0 %v887
      %v1012 = vpop.xlane.xlu0 %1011
      %1013 = vadd.xlane.f32.xlu0 %v888
      %v1014 = vpop.xlane.xlu0 %1013
      %1015 = vadd.xlane.f32.xlu0 %v889
      %v1016 = vpop.xlane.xlu0 %1015
      %1017 = vadd.xlane.f32.xlu0 %v890
      %v1018 = vpop.xlane.xlu0 %1017
      %v1019 = vadd.f32 %v971, %v988
      %v1020 = vadd.f32 %v972, %v990
      %v1021 = vadd.f32 %v973, %v992
      %v1022 = vadd.f32 %v974, %v994
      %v1023 = vadd.f32 %v975, %v996
      %v1024 = vadd.f32 %v976, %v998
      %v1025 = vadd.f32 %v977, %v1000
      %v1026 = vadd.f32 %v978, %v1002
      %v1027 = vadd.f32 %v979, %v1004
      %v1028 = vadd.f32 %v980, %v1006
      %v1029 = vadd.f32 %v981, %v1008
      %v1030 = vadd.f32 %v982, %v1010
      %v1031 = vadd.f32 %v983, %v1012
      %v1032 = vadd.f32 %v984, %v1014
      %v1033 = vadd.f32 %v985, %v1016
      %v1034 = vadd.f32 %v986, %v1018
      %vm1035 = vcmask 7168
      %1036 = vst.msk [vmem:[%s8] sm:$0xff] %vm1035, %v1019
      %1037 = vst.msk [vmem:[%s8 + $0x8] sm:$0xff] %vm1035, %v1020
      %1038 = vst.msk [vmem:[%s8 + $0x10] sm:$0xff] %vm1035, %v1021
      %1039 = vst.msk [vmem:[%s8 + $0x18] sm:$0xff] %vm1035, %v1022
      %1040 = vst.msk [vmem:[%s8 + $0x20] sm:$0xff] %vm1035, %v1023
      %1041 = vst.msk [vmem:[%s8 + $0x28] sm:$0xff] %vm1035, %v1024
      %1042 = vst.msk [vmem:[%s8 + $0x30] sm:$0xff] %vm1035, %v1025
      %1043 = vst.msk [vmem:[%s8 + $0x38] sm:$0xff] %vm1035, %v1026
      %1044 = vst.msk [vmem:[%s8 + $0x40] sm:$0xff] %vm1035, %v1027
      %1045 = vst.msk [vmem:[%s8 + $0x48] sm:$0xff] %vm1035, %v1028
      %1046 = vst.msk [vmem:[%s8 + $0x50] sm:$0xff] %vm1035, %v1029
      %1047 = vst.msk [vmem:[%s8 + $0x58] sm:$0xff] %vm1035, %v1030
      %1048 = vst.msk [vmem:[%s8 + $0x60] sm:$0xff] %vm1035, %v1031
      %1049 = vst.msk [vmem:[%s8 + $0x68] sm:$0xff] %vm1035, %v1032
      %1050 = vst.msk [vmem:[%s8 + $0x70] sm:$0xff] %vm1035, %v1033
      %1051 = vst.msk [vmem:[%s8 + $0x78] sm:$0xff] %vm1035, %v1034
    $region37: #{tpu_custom_call.1} parent=1 // pred_fallthru
      _
    // Predicated region
    $region38: #{tpu_custom_call.1} parent=1 // pred_check
      %p1052 = pneg %p29
    $region39: #{tpu_custom_call.1} parent=1 // pred_check_branch
      %1054 = sbr.rel (%p1052) target = $region41
    $region40: #{tpu_custom_call.1} parent=1 // pred_region
      %v1055 = vld [vmem:[%s8] sm:$0xff]
      %v1056 = vld [vmem:[%s8 + $0x8] sm:$0xff]
      %v1057 = vld [vmem:[%s8 + $0x10] sm:$0xff]
      %v1058 = vld [vmem:[%s8 + $0x18] sm:$0xff]
      %v1059 = vld [vmem:[%s8 + $0x20] sm:$0xff]
      %v1060 = vld [vmem:[%s8 + $0x28] sm:$0xff]
      %v1061 = vld [vmem:[%s8 + $0x30] sm:$0xff]
      %v1062 = vld [vmem:[%s8 + $0x38] sm:$0xff]
      %v1063 = vld [vmem:[%s8 + $0x40] sm:$0xff]
      %v1064 = vld [vmem:[%s8 + $0x48] sm:$0xff]
      %v1065 = vld [vmem:[%s8 + $0x50] sm:$0xff]
      %v1066 = vld [vmem:[%s8 + $0x58] sm:$0xff]
      %v1067 = vld [vmem:[%s8 + $0x60] sm:$0xff]
      %v1068 = vld [vmem:[%s8 + $0x68] sm:$0xff]
      %v1069 = vld [vmem:[%s8 + $0x70] sm:$0xff]
      %v1070 = vld [vmem:[%s8 + $0x78] sm:$0xff]
      %v1071 = vmax.f32 %v1055, 1e-12
      %v1072 = vmax.f32 %v1056, 1e-12
      %v1073 = vmax.f32 %v1057, 1e-12
      %v1074 = vmax.f32 %v1058, 1e-12
      %v1075 = vmax.f32 %v1059, 1e-12
      %v1076 = vmax.f32 %v1060, 1e-12
      %v1077 = vmax.f32 %v1061, 1e-12
      %v1078 = vmax.f32 %v1062, 1e-12
      %v1079 = vmax.f32 %v1063, 1e-12
      %v1080 = vmax.f32 %v1064, 1e-12
      %v1081 = vmax.f32 %v1065, 1e-12
      %v1082 = vmax.f32 %v1066, 1e-12
      %v1083 = vmax.f32 %v1067, 1e-12
      %v1084 = vmax.f32 %v1068, 1e-12
      %v1085 = vmax.f32 %v1069, 1e-12
      %v1086 = vmax.f32 %v1070, 1e-12
      %v1087 = vrsqrt.pop %v1071
      %v1088 = vrsqrt.pop %v1072
      %v1089 = vrsqrt.pop %v1073
      %v1090 = vrsqrt.pop %v1074
      %v1091 = vrsqrt.pop %v1075
      %v1092 = vrsqrt.pop %v1076
      %v1093 = vrsqrt.pop %v1077
      %v1094 = vrsqrt.pop %v1078
      %v1095 = vrsqrt.pop %v1079
      %v1096 = vrsqrt.pop %v1080
      %v1097 = vrsqrt.pop %v1081
      %v1098 = vrsqrt.pop %v1082
      %v1099 = vrsqrt.pop %v1083
      %v1100 = vrsqrt.pop %v1084
      %v1101 = vrsqrt.pop %v1085
      %v1102 = vrsqrt.pop %v1086
      %vm1103 = vcmask 7168
      %1104 = vst.msk [vmem:[%s8] sm:$0xff] %vm1103, %v1087
      %1105 = vst.msk [vmem:[%s8 + $0x8] sm:$0xff] %vm1103, %v1088
      %1106 = vst.msk [vmem:[%s8 + $0x10] sm:$0xff] %vm1103, %v1089
      %1107 = vst.msk [vmem:[%s8 + $0x18] sm:$0xff] %vm1103, %v1090
      %1108 = vst.msk [vmem:[%s8 + $0x20] sm:$0xff] %vm1103, %v1091
      %1109 = vst.msk [vmem:[%s8 + $0x28] sm:$0xff] %vm1103, %v1092
      %1110 = vst.msk [vmem:[%s8 + $0x30] sm:$0xff] %vm1103, %v1093
      %1111 = vst.msk [vmem:[%s8 + $0x38] sm:$0xff] %vm1103, %v1094
      %1112 = vst.msk [vmem:[%s8 + $0x40] sm:$0xff] %vm1103, %v1095
      %1113 = vst.msk [vmem:[%s8 + $0x48] sm:$0xff] %vm1103, %v1096
      %1114 = vst.msk [vmem:[%s8 + $0x50] sm:$0xff] %vm1103, %v1097
      %1115 = vst.msk [vmem:[%s8 + $0x58] sm:$0xff] %vm1103, %v1098
      %1116 = vst.msk [vmem:[%s8 + $0x60] sm:$0xff] %vm1103, %v1099
      %1117 = vst.msk [vmem:[%s8 + $0x68] sm:$0xff] %vm1103, %v1100
      %1118 = vst.msk [vmem:[%s8 + $0x70] sm:$0xff] %vm1103, %v1101
      %1119 = vst.msk [vmem:[%s8 + $0x78] sm:$0xff] %vm1103, %v1102
    $region41: #{tpu_custom_call.1} parent=1 // pred_fallthru
      _
    // Predicated region
    $region42: #{tpu_custom_call.1} parent=1 // pred_check
      _
    $region43: #{tpu_custom_call.1} parent=1 // pred_check_branch
      %1121 = sbr.rel (0) target = $region45
    $region44: #{tpu_custom_call.1} parent=1 // pred_region
      %s1123 = ssub.s32 1024, 1024
      %1124 = vsyncadd [#allocation5], %s1123
      %s1125 = sshll.u32 [#allocation4], 4
      %s1126 = int_to_ptr.vmem [resolvable:$true] %s1125
      %1131 = dma.vmem_to_hbm [thread:$0]  %s1126, 1024, %s7, [#allocation5], 64, 64, 4
    $region45: #{tpu_custom_call.1} parent=1 // pred_fallthru
      _
    // Predicated region
    $region46: #{tpu_custom_call.1} parent=1 // pred_check
      _
    $region47: #{tpu_custom_call.1} parent=1 // pred_check_branch
      %1133 = sbr.rel (0) target = $region49
    $region48: #{tpu_custom_call.1} parent=1 // pred_region
      _
    $region49: #{tpu_custom_call.1} parent=1 // pred_fallthru
      _
    // Predicated region
    $region50: #{tpu_custom_call.1} parent=1 // pred_check
      _
    $region51: #{tpu_custom_call.1} parent=1 // pred_check_branch
      %1135 = sbr.rel (0) target = $region53
    $region52: #{tpu_custom_call.1} parent=1 // pred_region
      %1136 = dma.done [#allocation5], 1024
    $region53: #{tpu_custom_call.1} parent=1 // pred_fallthru
      _
    // Predicated region
    $region54: #{tpu_custom_call.1} parent=1 // pred_check
      _
    $region55: #{tpu_custom_call.1} parent=1 // pred_check_branch
      %1138 = sbr.rel (0) target = $region57
    $region56: #{tpu_custom_call.1} parent=1 // pred_region
      _
    $region57: #{tpu_custom_call.1} parent=1 // pred_fallthru
      _
    %1139 = vsyncpa [#allocation5], 1

</llo_original>
